<compile_context>
chip_gen: v5e
topology: v5e:2x2
jax: 0.10.0
libtpu: 0.0.40
codegen_flags: <defaults>
</compile_context>

<pallas_src>
import functools

import jax
import jax.numpy as jnp
from jax.experimental import pallas as pl
from jax.experimental.pallas import tpu as pltpu


def _round_up(x, m):
    return ((x + m - 1) // m) * m


def _vmem_capacity_bytes():
    """Physical VMEM of the current chip; sizing-only query (not a correctness path)."""
    try:
        return int(pltpu.get_tpu_info().vmem_capacity_bytes)
    except Exception:  # fall back to the smallest generation (v7x: 64 MiB per core)
        return 64 * 1024 * 1024


def _item_ae_kernel(n_q, n_p, mxu_dtype, x_ref, *refs):
    """Fused encoder+decoder. refs = [wq0,bq0,...,wqN,bqN, wp0,bp0,...,wpM,bpM, out_ref]."""
    out_ref = refs[-1]
    param_refs = refs[:-1]

    # Feed the first matmul directly in the input dtype (no f32 round trip).
    h = x_ref[...]

    def layer(h, w_ref, b_ref, apply_tanh):
        w = w_ref[...]
        if mxu_dtype is not None:
            # bf16 MXU operands, cast in-vreg on the VPU; accumulate in f32.
            w = w.astype(mxu_dtype)
            h = h.astype(mxu_dtype)
        y = jnp.dot(h, w, preferred_element_type=jnp.float32)
        y = y + b_ref[...].astype(jnp.float32)   # bias add + tanh stay f32
        return jnp.tanh(y) if apply_tanh else y

    idx = 0
    # ---- encoder: every layer followed by tanh ----
    for _ in range(n_q):
        h = layer(h, param_refs[idx], param_refs[idx + 1], True)
        idx += 2
    # ---- decoder: tanh on all but the last layer ----
    for i in range(n_p):
        h = layer(h, param_refs[idx], param_refs[idx + 1], i != n_p - 1)
        idx += 2

    out_ref[...] = h.astype(out_ref.dtype)


def item_ae_forward(x, q_params, p_params, *, block_b=None, use_bf16_matmul=False,
                    vmem_limit_bytes=None):
    """x: (B, input_dim). q_params/p_params: lists of (W:(in,out), b:(1,out))."""
    B, D = x.shape
    n_q, n_p = len(q_params), len(p_params)
    all_params = list(q_params) + list(p_params)
    out_dim = all_params[-1][0].shape[1]
    out_dtype = x.dtype

    x_itemsize = jnp.dtype(x.dtype).itemsize
    out_itemsize = jnp.dtype(out_dtype).itemsize
    param_bytes = sum(w.size * jnp.dtype(w.dtype).itemsize
                      + b.size * jnp.dtype(b.dtype).itemsize for (w, b) in all_params)
    max_width = max(max(w.shape) for (w, _) in all_params)

    # ---- VMEM budget derived from the actual chip (v5e/v6e 128 MiB, v7x 64 MiB) ----
    vmem_phys = _vmem_capacity_bytes()
    vmem_cap = int(0.70 * vmem_phys)

    # ---- batch tiling: multiple of 8 sublanes, big by default, >= 2 grid steps ----
    if block_b is None:
        block_b = 2048
    block_b = max(8, _round_up(block_b, 8))
    min_steps = 2  # keep both v7x TensorCores busy and pipeline DMA/compute/writeback
    if B > 8 * min_steps:
        block_b = min(block_b, _round_up(pl.cdiv(B, min_steps), 8))
    block_b = max(8, min(block_b, _round_up(B, 8)))

    def tile_bytes(bb):
        return (2 * bb * D * x_itemsize            # double-buffered x tile
                + 2 * bb * out_dim * out_itemsize  # double-buffered out tile
                + 2 * param_bytes                  # resident (double-buffered) params
                + 3 * bb * max_width * 4)          # in-kernel f32 activation headroom

    while block_b > 8 and tile_bytes(block_b) > vmem_cap:
        block_b = max(8, _round_up(block_b // 2, 8))

    if vmem_limit_bytes is None:
        vmem_limit_bytes = min(int(0.85 * vmem_phys),
                               max(32 * 1024 * 1024,
                                   int(tile_bytes(block_b) * 1.25) + (4 << 20)))

    # ---- grid: partial last block handled by Pallas (row-independent compute,
    #            out-of-range rows of the last block are masked on write) ----
    grid = (pl.cdiv(B, block_b),)

    # ---- cost estimate for the XLA scheduler ----
    layer_dims = [(w.shape[0], w.shape[1]) for (w, _) in all_params]
    flops = 2 * B * sum(di * do for di, do in layer_dims)
    transcendentals = B * sum(do for _, do in layer_dims[:-1])  # tanh on all but last
    bytes_accessed = B * D * x_itemsize + param_bytes + B * out_dim * out_itemsize
    cost = pl.CostEstimate(flops=flops, transcendentals=transcendentals,
                           bytes_accessed=bytes_accessed)

    mxu_dtype = jnp.bfloat16 if use_bf16_matmul else None
    kernel = functools.partial(_item_ae_kernel, n_q, n_p, mxu_dtype)

    in_specs = [pl.BlockSpec((block_b, D), lambda i: (i, 0))]
    params_flat = []
    for (w, b) in all_params:
        params_flat += [w, b]
        # Constant-index param blocks: fully resident, never re-fetched across steps.
        in_specs.append(pl.BlockSpec(w.shape, lambda i: (0, 0)))
        in_specs.append(pl.BlockSpec(b.shape, lambda i: (0, 0)))

    out = pl.pallas_call(
        kernel,
        out_shape=jax.ShapeDtypeStruct((B, out_dim), out_dtype),
        grid=grid,
        in_specs=in_specs,
        out_specs=pl.BlockSpec((block_b, out_dim), lambda i: (i, 0)),
        compiler_params=pltpu.CompilerParams(
            dimension_semantics=("parallel",),
            vmem_limit_bytes=vmem_limit_bytes),
        cost_estimate=cost,
    )(x, *params_flat)
    return out
    # TODO(synk): for production item catalogs (D ~ tens of thousands) the first/last
    # layer weights no longer fit resident in v7x's 64 MiB VMEM: add an 'arbitrary'
    # K-reduction grid axis for those layers (256-deep bf16 K tiles, f32 VMEM
    # accumulator, pl.when init/finalize) instead of holding them fully resident.


def init_linear_params(key, dims):
    """Deterministic init mimicking torch.nn.Linear: U(-1/sqrt(fan_in), 1/sqrt(fan_in)).

    Returns list of (W:(in,out), b:(1,out)) for consecutive dim pairs."""
    params = []
    for d_in, d_out in zip(dims[:-1], dims[1:]):
        key, kw, kb = jax.random.split(key, 3)
        bound = 1.0 / jnp.sqrt(jnp.float32(d_in))
        w = jax.random.uniform(kw, (d_in, d_out), jnp.float32, -bound, bound)
        b = jax.random.uniform(kb, (1, d_out), jnp.float32, -bound, bound)
        params.append((w, b))
    return params, key


def item_ae_reference(x, q_params, p_params):
    h = x
    for (w, b) in q_params:
        h = jnp.tanh(h @ w + b)
    for i, (w, b) in enumerate(p_params):
        h = h @ w + b
        if i != len(p_params) - 1:
            h = jnp.tanh(h)
    return h


if __name__ == "__main__":
    # Module-consistent shapes: input_dim=128 items, hidden_dim=[64, 32]
    #   -> q_dims=[128,64,32], p_dims=[32,64,128].
    # batch=500 exercises the partial-last-block path (no padding, no output slice).
    input_dim = 128
    hidden_dim = [64, 32]
    batch = 500

    q_dims = [input_dim] + hidden_dim
    p_dims = q_dims[::-1]

    key = jax.random.PRNGKey(0)
    q_params, key = init_linear_params(key, q_dims)
    p_params, key = init_linear_params(key, p_dims)
    key, kx = jax.random.split(key)
    x = jax.random.uniform(kx, (batch, input_dim), jnp.float32)  # implicit-feedback input

    ref = item_ae_reference(x, q_params, p_params)

    # f32 path, explicit 128-row tile -> grid=(4,) with a masked partial last block.
    out = item_ae_forward(x, q_params, p_params, block_b=128)
    out = jax.block_until_ready(out)
    assert out.shape == (batch, input_dim)
    assert jnp.allclose(out, ref, atol=1e-5, rtol=1e-5)

    # Default tiling path (block_b auto-sized, >= 2 grid steps for megacore).
    out_auto = item_ae_forward(x, q_params, p_params)
    out_auto = jax.block_until_ready(out_auto)
    assert out_auto.shape == (batch, input_dim)
    assert jnp.allclose(out_auto, ref, atol=1e-5, rtol=1e-5)

    # bf16 MXU-operand path (in-kernel cast; f32 accumulation / bias / tanh).
    out_bf16 = item_ae_forward(x, q_params, p_params, block_b=128, use_bf16_matmul=True)
    out_bf16 = jax.block_until_ready(out_bf16)
    assert out_bf16.shape == (batch, input_dim)
    assert jnp.allclose(out_bf16, ref, atol=5e-2, rtol=5e-2)

    print("KERNEL_OK")
</pallas_src>

<mosaic_0001>
module attributes {stable_mosaic.version = 11 : i64} {
  func.func @_item_ae_kernel(%arg0: i32, %arg1: memref<128x128xf32, #tpu.memory_space<vmem>>, %arg2: memref<128x64xf32, #tpu.memory_space<vmem>>, %arg3: memref<1x64xf32, #tpu.memory_space<vmem>>, %arg4: memref<64x32xf32, #tpu.memory_space<vmem>>, %arg5: memref<1x32xf32, #tpu.memory_space<vmem>>, %arg6: memref<32x64xf32, #tpu.memory_space<vmem>>, %arg7: memref<1x64xf32, #tpu.memory_space<vmem>>, %arg8: memref<64x128xf32, #tpu.memory_space<vmem>>, %arg9: memref<1x128xf32, #tpu.memory_space<vmem>>, %arg10: memref<128x128xf32, #tpu.memory_space<vmem>>) attributes {dimension_semantics = [#tpu.dimension_semantics<parallel>], iteration_bounds = array<i64: 4>, scalar_prefetch = 0 : i64, scratch_operands = 0 : i64, tpu.core_type = #tpu.core_type<tc>, window_params = [{transform_indices = @transform_0, window_bounds = array<i64: 128, 128>}, {pipeline_mode = #tpu.pipeline_mode<synchronous>, transform_indices = @transform_1, window_bounds = array<i64: 128, 64>}, {pipeline_mode = #tpu.pipeline_mode<synchronous>, transform_indices = @transform_2, window_bounds = array<i64: 1, 64>}, {pipeline_mode = #tpu.pipeline_mode<synchronous>, transform_indices = @transform_3, window_bounds = array<i64: 64, 32>}, {pipeline_mode = #tpu.pipeline_mode<synchronous>, transform_indices = @transform_4, window_bounds = array<i64: 1, 32>}, {pipeline_mode = #tpu.pipeline_mode<synchronous>, transform_indices = @transform_5, window_bounds = array<i64: 32, 64>}, {pipeline_mode = #tpu.pipeline_mode<synchronous>, transform_indices = @transform_6, window_bounds = array<i64: 1, 64>}, {pipeline_mode = #tpu.pipeline_mode<synchronous>, transform_indices = @transform_7, window_bounds = array<i64: 64, 128>}, {pipeline_mode = #tpu.pipeline_mode<synchronous>, transform_indices = @transform_8, window_bounds = array<i64: 1, 128>}, {transform_indices = @transform_9, window_bounds = array<i64: 128, 128>}]} {
    %c0 = arith.constant 0 : index
    %c0_0 = arith.constant 0 : index
    %0 = vector.load %arg1[%c0, %c0_0] : memref<128x128xf32, #tpu.memory_space<vmem>>, vector<128x128xf32>
    %c0_1 = arith.constant 0 : index
    %c0_2 = arith.constant 0 : index
    %1 = vector.load %arg2[%c0_1, %c0_2] : memref<128x64xf32, #tpu.memory_space<vmem>>, vector<128x64xf32>
    %cst = arith.constant dense<0.000000e+00> : vector<128x64xf32>
    %2 = tpu.matmul %0, %1, %cst {dimension_numbers = #tpu.dot_dimension_numbers<[1], [0], [0], [1], [0, 0, 1, 1], [], []>} : vector<128x128xf32>, vector<128x64xf32>, vector<128x64xf32> -> vector<128x64xf32>
    %c0_3 = arith.constant 0 : index
    %c0_4 = arith.constant 0 : index
    %3 = vector.load %arg3[%c0_3, %c0_4] : memref<1x64xf32, #tpu.memory_space<vmem>>, vector<1x64xf32>
    %4 = vector.broadcast %3 : vector<1x64xf32> to vector<128x64xf32>
    %5 = arith.addf %2, %4 : vector<128x64xf32>
    %6 = math.tanh %5 : vector<128x64xf32>
    %c0_5 = arith.constant 0 : index
    %c0_6 = arith.constant 0 : index
    %7 = vector.load %arg4[%c0_5, %c0_6] : memref<64x32xf32, #tpu.memory_space<vmem>>, vector<64x32xf32>
    %cst_7 = arith.constant dense<0.000000e+00> : vector<128x32xf32>
    %8 = tpu.matmul %6, %7, %cst_7 {dimension_numbers = #tpu.dot_dimension_numbers<[1], [0], [0], [1], [0, 0, 1, 1], [], []>} : vector<128x64xf32>, vector<64x32xf32>, vector<128x32xf32> -> vector<128x32xf32>
    %c0_8 = arith.constant 0 : index
    %c0_9 = arith.constant 0 : index
    %9 = vector.load %arg5[%c0_8, %c0_9] : memref<1x32xf32, #tpu.memory_space<vmem>>, vector<1x32xf32>
    %10 = vector.broadcast %9 : vector<1x32xf32> to vector<128x32xf32>
    %11 = arith.addf %8, %10 : vector<128x32xf32>
    %12 = math.tanh %11 : vector<128x32xf32>
    %c0_10 = arith.constant 0 : index
    %c0_11 = arith.constant 0 : index
    %13 = vector.load %arg6[%c0_10, %c0_11] : memref<32x64xf32, #tpu.memory_space<vmem>>, vector<32x64xf32>
    %cst_12 = arith.constant dense<0.000000e+00> : vector<128x64xf32>
    %14 = tpu.matmul %12, %13, %cst_12 {dimension_numbers = #tpu.dot_dimension_numbers<[1], [0], [0], [1], [0, 0, 1, 1], [], []>} : vector<128x32xf32>, vector<32x64xf32>, vector<128x64xf32> -> vector<128x64xf32>
    %c0_13 = arith.constant 0 : index
    %c0_14 = arith.constant 0 : index
    %15 = vector.load %arg7[%c0_13, %c0_14] : memref<1x64xf32, #tpu.memory_space<vmem>>, vector<1x64xf32>
    %16 = vector.broadcast %15 : vector<1x64xf32> to vector<128x64xf32>
    %17 = arith.addf %14, %16 : vector<128x64xf32>
    %18 = math.tanh %17 : vector<128x64xf32>
    %c0_15 = arith.constant 0 : index
    %c0_16 = arith.constant 0 : index
    %19 = vector.load %arg8[%c0_15, %c0_16] : memref<64x128xf32, #tpu.memory_space<vmem>>, vector<64x128xf32>
    %cst_17 = arith.constant dense<0.000000e+00> : vector<128x128xf32>
    %20 = tpu.matmul %18, %19, %cst_17 {dimension_numbers = #tpu.dot_dimension_numbers<[1], [0], [0], [1], [0, 0, 1, 1], [], []>} : vector<128x64xf32>, vector<64x128xf32>, vector<128x128xf32> -> vector<128x128xf32>
    %c0_18 = arith.constant 0 : index
    %c0_19 = arith.constant 0 : index
    %21 = vector.load %arg9[%c0_18, %c0_19] : memref<1x128xf32, #tpu.memory_space<vmem>>, vector<1x128xf32>
    %22 = vector.broadcast %21 : vector<1x128xf32> to vector<128x128xf32>
    %23 = arith.addf %20, %22 : vector<128x128xf32>
    %c0_20 = arith.constant 0 : index
    %c0_21 = arith.constant 0 : index
    %24 = vector.load %arg10[%c0_20, %c0_21] : memref<128x128xf32, #tpu.memory_space<vmem>>, vector<128x128xf32>
    tpu.vector_store %arg10[%c0_20, %c0_21], %23 {strides = array<i32>} : memref<128x128xf32, #tpu.memory_space<vmem>>, vector<128x128xf32>,
    return
  }
  func.func @transform_0(%arg0: i32) -> (i32, i32) {
    %c0_i32 = arith.constant 0 : i32
    %c0_i32_0 = arith.constant 0 : i32
    return %arg0, %c0_i32 : i32, i32
  }
  func.func @transform_1(%arg0: i32) -> (i32, i32) {
    %c0_i32 = arith.constant 0 : i32
    %c0_i32_0 = arith.constant 0 : i32
    %c0_i32_1 = arith.constant 0 : i32
    return %c0_i32, %c0_i32_0 : i32, i32
  }
  func.func @transform_2(%arg0: i32) -> (i32, i32) {
    %c0_i32 = arith.constant 0 : i32
    %c0_i32_0 = arith.constant 0 : i32
    %c0_i32_1 = arith.constant 0 : i32
    return %c0_i32, %c0_i32_0 : i32, i32
  }
  func.func @transform_3(%arg0: i32) -> (i32, i32) {
    %c0_i32 = arith.constant 0 : i32
    %c0_i32_0 = arith.constant 0 : i32
    %c0_i32_1 = arith.constant 0 : i32
    return %c0_i32, %c0_i32_0 : i32, i32
  }
  func.func @transform_4(%arg0: i32) -> (i32, i32) {
    %c0_i32 = arith.constant 0 : i32
    %c0_i32_0 = arith.constant 0 : i32
    %c0_i32_1 = arith.constant 0 : i32
    return %c0_i32, %c0_i32_0 : i32, i32
  }
  func.func @transform_5(%arg0: i32) -> (i32, i32) {
    %c0_i32 = arith.constant 0 : i32
    %c0_i32_0 = arith.constant 0 : i32
    %c0_i32_1 = arith.constant 0 : i32
    return %c0_i32, %c0_i32_0 : i32, i32
  }
  func.func @transform_6(%arg0: i32) -> (i32, i32) {
    %c0_i32 = arith.constant 0 : i32
    %c0_i32_0 = arith.constant 0 : i32
    %c0_i32_1 = arith.constant 0 : i32
    return %c0_i32, %c0_i32_0 : i32, i32
  }
  func.func @transform_7(%arg0: i32) -> (i32, i32) {
    %c0_i32 = arith.constant 0 : i32
    %c0_i32_0 = arith.constant 0 : i32
    %c0_i32_1 = arith.constant 0 : i32
    return %c0_i32, %c0_i32_0 : i32, i32
  }
  func.func @transform_8(%arg0: i32) -> (i32, i32) {
    %c0_i32 = arith.constant 0 : i32
    %c0_i32_0 = arith.constant 0 : i32
    %c0_i32_1 = arith.constant 0 : i32
    return %c0_i32, %c0_i32_0 : i32, i32
  }
  func.func @transform_9(%arg0: i32) -> (i32, i32) {
    %c0_i32 = arith.constant 0 : i32
    %c0_i32_0 = arith.constant 0 : i32
    return %arg0, %c0_i32 : i32, i32
  }
}

</mosaic_0001>

<llo_original>
// kernel: tpu_custom_call.1
$region0: #{tpu_custom_call.1}
  #allocation0 [shape = 'u32[]', space=smem, size = 0x4, offset = 0x4, fixed_abs, tag = 'smem constant byte address 0x4 - core index']
  #allocation1 [shape = 'u32[72,128]{1,0:T(1,128)}', space=vmem, size = 0x9000, scoped, tag = 'internal scratch']
  %s0 = inlined_call_operand.hbm [shape: f32[500,128], index: 0, kind: input, shape index: {}]
  %s1 = inlined_call_operand.vmem [shape: f32[128,64], index: 1, kind: input, shape index: {}]
  %s2 = inlined_call_operand.vmem [shape: f32[1,64], index: 2, kind: input, shape index: {}]
  %s3 = inlined_call_operand.vmem [shape: f32[64,32], index: 3, kind: input, shape index: {}]
  %s4 = inlined_call_operand.vmem [shape: f32[1,32], index: 4, kind: input, shape index: {}]
  %s5 = inlined_call_operand.vmem [shape: f32[32,64], index: 5, kind: input, shape index: {}]
  %s6 = inlined_call_operand.vmem [shape: f32[1,64], index: 6, kind: input, shape index: {}]
  %s7 = inlined_call_operand.vmem [shape: f32[64,128], index: 7, kind: input, shape index: {}]
  %s8 = inlined_call_operand.vmem [shape: f32[1,128], index: 8, kind: input, shape index: {}]
  %s9 = inlined_call_operand.hbm [shape: f32[500,128], index: 9, kind: output, shape index: {}]
  %s10 = sld [smem:[#allocation0]]
  $region73: #{tpu_custom_call.1} parent=0
    _
  %s12 = ssub.s32 1, %s10
  %s13 = scalar_select 0, %s12, %s10
  $region1: #{tpu_custom_call.1} parent=0
    #allocation2 [shape = 'u8[131072]{0}', space=vmem, size = 0x20000, scoped, tag = 'input window, operand 0']
    #allocation3 [shape = 's32[2]{0}', space=sflag, size = 0x8, scoped, tag = 'scoped memory for tpu_custom_call.1']
    #allocation4 [shape = 's32[2]{0}', space=sflag, size = 0x8, scoped, tag = 'scoped memory for tpu_custom_call.1']
    #allocation5 [shape = 'u8[131072]{0}', space=vmem, size = 0x20000, scoped, tag = 'output window, operand 0']
    %14 = vsyncpa [#allocation3], 0
    %s15 = scalar_lea.sflag [#allocation3], 1
    %16 = vsyncpa %s15, 0
    %17 = vsyncpa [#allocation4], 0
    %s18 = scalar_lea.sflag [#allocation4], 1
    %19 = vsyncpa %s18, 0
    loop: start=0, step=1, limit=6
    $region2: #{tpu_custom_call.1} parent=1 // loop_pre_header
      _
    $region3: #{tpu_custom_call.1} parent=1 // loop_header
      %s21 = sphi 0, %s25
      %p22 = scmp.ge.s32.totalorder %s21, 6
      %s31 = sphi 0, %s33
      %s34 = sphi 0, %s31
      %s35 = sphi 0, %s34
      %s51 = sphi 0, %s35
      %s55 = sphi 0, %s55
      %s57 = sphi 0, %s55
      %s58 = sphi 0, %s57
      %s72 = sphi 0, %s58
      %s76 = sphi 0, %s76
      %s78 = sphi 0, %s76
      %s79 = sphi 0, %s78
      %s93 = sphi 0, %s79
      %s97 = sphi 0, %s97
      %s99 = sphi 0, %s97
      %s100 = sphi 0, %s99
      %s114 = sphi 0, %s100
      %s118 = sphi 0, %s118
      %s120 = sphi 0, %s118
      %s121 = sphi 0, %s120
      %s135 = sphi 0, %s121
      %s139 = sphi 0, %s139
      %s141 = sphi 0, %s139
      %s142 = sphi 0, %s141
      %s156 = sphi 0, %s142
      %s160 = sphi 0, %s160
      %s162 = sphi 0, %s160
      %s163 = sphi 0, %s162
      %s177 = sphi 0, %s163
      %s181 = sphi 0, %s181
      %s183 = sphi 0, %s181
      %s184 = sphi 0, %s183
      %s198 = sphi 0, %s184
      %s202 = sphi 0, %s202
      %s204 = sphi 0, %s202
      %s205 = sphi 0, %s204
      %s219 = sphi 0, %s205
      %s225 = sphi 0, %s227
      %s228 = sphi 0, %s225
      %s229 = sphi 0, %s228
      %s245 = sphi 0, %s229
    $region4: #{tpu_custom_call.1} parent=1 // loop_header_branch
      %24 = sbr.rel (%p22) target = $region8
    $region5: #{tpu_custom_call.1} parent=1 // loop_body
      %s26 = ssub.s32 %s21, 1
      %s27 = ssub.s32 %s21, 2
      %s28 = sadd.s32 %s21, 1
      %s29 = ssub.s32 %s21, %s28
      %p30 = scmp.eq.s32.totalorder %s29, 0
      %s32 = sadd.s32 %s31, 1
      %s33 = scalar_select %p30, %s31, %s32
      %p36 = pneg %p30
      %p37 = scmp.eq.s32.totalorder %s21, 3
      %p38 = por %p36, %p37
      %p39 = scmp.ne.s32.totalorder %s31, %s34
      %p40 = scmp.eq.s32.totalorder %s21, 0
      %p41 = por %p39, %p40
      %p42 = scmp.ne.s32.totalorder %s31, %s34
      %p43 = scmp.eq.s32.totalorder %s26, 3
      %p44 = por %p42, %p43
      %p45 = scmp.ne.s32.totalorder %s34, %s35
      %p46 = scmp.eq.s32.totalorder %s26, 0
      %p47 = por %p45, %p46
      %p48 = scmp.ne.s32.totalorder %s34, %s35
      %p49 = scmp.eq.s32.totalorder %s27, 3
      %p50 = por %p48, %p49
      %p52 = scmp.ne.s32.totalorder %s35, %s51
      %p53 = scmp.eq.s32.totalorder %s27, 0
      %p54 = por %p52, %p53
      %s56 = sadd.s32 %s55, 1
      %p59 = scmp.eq.s32.totalorder %s21, 3
      %p60 = scmp.ne.s32.totalorder %s55, %s57
      %p61 = scmp.eq.s32.totalorder %s21, 0
      %p62 = por %p60, %p61
      %p63 = scmp.ne.s32.totalorder %s55, %s57
      %p64 = scmp.eq.s32.totalorder %s26, 3
      %p65 = por %p63, %p64
      %p66 = scmp.ne.s32.totalorder %s57, %s58
      %p67 = scmp.eq.s32.totalorder %s26, 0
      %p68 = por %p66, %p67
      %p69 = scmp.ne.s32.totalorder %s57, %s58
      %p70 = scmp.eq.s32.totalorder %s27, 3
      %p71 = por %p69, %p70
      %p73 = scmp.ne.s32.totalorder %s58, %s72
      %p74 = scmp.eq.s32.totalorder %s27, 0
      %p75 = por %p73, %p74
      %s77 = sadd.s32 %s76, 1
      %p80 = scmp.eq.s32.totalorder %s21, 3
      %p81 = scmp.ne.s32.totalorder %s76, %s78
      %p82 = scmp.eq.s32.totalorder %s21, 0
      %p83 = por %p81, %p82
      %p84 = scmp.ne.s32.totalorder %s76, %s78
      %p85 = scmp.eq.s32.totalorder %s26, 3
      %p86 = por %p84, %p85
      %p87 = scmp.ne.s32.totalorder %s78, %s79
      %p88 = scmp.eq.s32.totalorder %s26, 0
      %p89 = por %p87, %p88
      %p90 = scmp.ne.s32.totalorder %s78, %s79
      %p91 = scmp.eq.s32.totalorder %s27, 3
      %p92 = por %p90, %p91
      %p94 = scmp.ne.s32.totalorder %s79, %s93
      %p95 = scmp.eq.s32.totalorder %s27, 0
      %p96 = por %p94, %p95
      %s98 = sadd.s32 %s97, 1
      %p101 = scmp.eq.s32.totalorder %s21, 3
      %p102 = scmp.ne.s32.totalorder %s97, %s99
      %p103 = scmp.eq.s32.totalorder %s21, 0
      %p104 = por %p102, %p103
      %p105 = scmp.ne.s32.totalorder %s97, %s99
      %p106 = scmp.eq.s32.totalorder %s26, 3
      %p107 = por %p105, %p106
      %p108 = scmp.ne.s32.totalorder %s99, %s100
      %p109 = scmp.eq.s32.totalorder %s26, 0
      %p110 = por %p108, %p109
      %p111 = scmp.ne.s32.totalorder %s99, %s100
      %p112 = scmp.eq.s32.totalorder %s27, 3
      %p113 = por %p111, %p112
      %p115 = scmp.ne.s32.totalorder %s100, %s114
      %p116 = scmp.eq.s32.totalorder %s27, 0
      %p117 = por %p115, %p116
      %s119 = sadd.s32 %s118, 1
      %p122 = scmp.eq.s32.totalorder %s21, 3
      %p123 = scmp.ne.s32.totalorder %s118, %s120
      %p124 = scmp.eq.s32.totalorder %s21, 0
      %p125 = por %p123, %p124
      %p126 = scmp.ne.s32.totalorder %s118, %s120
      %p127 = scmp.eq.s32.totalorder %s26, 3
      %p128 = por %p126, %p127
      %p129 = scmp.ne.s32.totalorder %s120, %s121
      %p130 = scmp.eq.s32.totalorder %s26, 0
      %p131 = por %p129, %p130
      %p132 = scmp.ne.s32.totalorder %s120, %s121
      %p133 = scmp.eq.s32.totalorder %s27, 3
      %p134 = por %p132, %p133
      %p136 = scmp.ne.s32.totalorder %s121, %s135
      %p137 = scmp.eq.s32.totalorder %s27, 0
      %p138 = por %p136, %p137
      %s140 = sadd.s32 %s139, 1
      %p143 = scmp.eq.s32.totalorder %s21, 3
      %p144 = scmp.ne.s32.totalorder %s139, %s141
      %p145 = scmp.eq.s32.totalorder %s21, 0
      %p146 = por %p144, %p145
      %p147 = scmp.ne.s32.totalorder %s139, %s141
      %p148 = scmp.eq.s32.totalorder %s26, 3
      %p149 = por %p147, %p148
      %p150 = scmp.ne.s32.totalorder %s141, %s142
      %p151 = scmp.eq.s32.totalorder %s26, 0
      %p152 = por %p150, %p151
      %p153 = scmp.ne.s32.totalorder %s141, %s142
      %p154 = scmp.eq.s32.totalorder %s27, 3
      %p155 = por %p153, %p154
      %p157 = scmp.ne.s32.totalorder %s142, %s156
      %p158 = scmp.eq.s32.totalorder %s27, 0
      %p159 = por %p157, %p158
      %s161 = sadd.s32 %s160, 1
      %p164 = scmp.eq.s32.totalorder %s21, 3
      %p165 = scmp.ne.s32.totalorder %s160, %s162
      %p166 = scmp.eq.s32.totalorder %s21, 0
      %p167 = por %p165, %p166
      %p168 = scmp.ne.s32.totalorder %s160, %s162
      %p169 = scmp.eq.s32.totalorder %s26, 3
      %p170 = por %p168, %p169
      %p171 = scmp.ne.s32.totalorder %s162, %s163
      %p172 = scmp.eq.s32.totalorder %s26, 0
      %p173 = por %p171, %p172
      %p174 = scmp.ne.s32.totalorder %s162, %s163
      %p175 = scmp.eq.s32.totalorder %s27, 3
      %p176 = por %p174, %p175
      %p178 = scmp.ne.s32.totalorder %s163, %s177
      %p179 = scmp.eq.s32.totalorder %s27, 0
      %p180 = por %p178, %p179
      %s182 = sadd.s32 %s181, 1
      %p185 = scmp.eq.s32.totalorder %s21, 3
      %p186 = scmp.ne.s32.totalorder %s181, %s183
      %p187 = scmp.eq.s32.totalorder %s21, 0
      %p188 = por %p186, %p187
      %p189 = scmp.ne.s32.totalorder %s181, %s183
      %p190 = scmp.eq.s32.totalorder %s26, 3
      %p191 = por %p189, %p190
      %p192 = scmp.ne.s32.totalorder %s183, %s184
      %p193 = scmp.eq.s32.totalorder %s26, 0
      %p194 = por %p192, %p193
      %p195 = scmp.ne.s32.totalorder %s183, %s184
      %p196 = scmp.eq.s32.totalorder %s27, 3
      %p197 = por %p195, %p196
      %p199 = scmp.ne.s32.totalorder %s184, %s198
      %p200 = scmp.eq.s32.totalorder %s27, 0
      %p201 = por %p199, %p200
      %s203 = sadd.s32 %s202, 1
      %p206 = scmp.eq.s32.totalorder %s21, 3
      %p207 = scmp.ne.s32.totalorder %s202, %s204
      %p208 = scmp.eq.s32.totalorder %s21, 0
      %p209 = por %p207, %p208
      %p210 = scmp.ne.s32.totalorder %s202, %s204
      %p211 = scmp.eq.s32.totalorder %s26, 3
      %p212 = por %p210, %p211
      %p213 = scmp.ne.s32.totalorder %s204, %s205
      %p214 = scmp.eq.s32.totalorder %s26, 0
      %p215 = por %p213, %p214
      %p216 = scmp.ne.s32.totalorder %s204, %s205
      %p217 = scmp.eq.s32.totalorder %s27, 3
      %p218 = por %p216, %p217
      %p220 = scmp.ne.s32.totalorder %s205, %s219
      %p221 = scmp.eq.s32.totalorder %s27, 0
      %p222 = por %p220, %p221
      %s223 = ssub.s32 %s21, %s28
      %p224 = scmp.eq.s32.totalorder %s223, 0
      %s226 = sadd.s32 %s225, 1
      %s227 = scalar_select %p224, %s225, %s226
      %p230 = pneg %p224
      %p231 = scmp.eq.s32.totalorder %s21, 3
      %p232 = por %p230, %p231
      %p233 = scmp.ne.s32.totalorder %s225, %s228
      %p234 = scmp.eq.s32.totalorder %s21, 0
      %p235 = por %p233, %p234
      %p236 = scmp.ne.s32.totalorder %s225, %s228
      %p237 = scmp.eq.s32.totalorder %s26, 3
      %p238 = por %p236, %p237
      %p239 = scmp.ne.s32.totalorder %s228, %s229
      %p240 = scmp.eq.s32.totalorder %s26, 0
      %p241 = por %p239, %p240
      %p242 = scmp.ne.s32.totalorder %s228, %s229
      %p243 = scmp.eq.s32.totalorder %s27, 3
      %p244 = por %p242, %p243
      %p246 = scmp.ne.s32.totalorder %s229, %s245
      %p247 = scmp.eq.s32.totalorder %s27, 0
      %p248 = por %p246, %p247
      %p249 = scmp.le.s32.totalorder 1, %s21
      %p250 = scmp.lt.s32.totalorder %s21, 5
      %p251 = pnand %p249, %p250
      %p252 = pneg %p251
      // Predicated region
      $region9: #{tpu_custom_call.1} parent=5 // pred_check
        _
      $region10: #{tpu_custom_call.1} parent=5 // pred_check_branch
        %254 = sbr.rel (%p251) target = $region12
      $region11: #{tpu_custom_call.1} parent=5 // pred_region
        %s255 = ssub.s32 %s21, 1
        // Predicated region
        $region13: #{tpu_custom_call.1} parent=11 // pred_check
          %p256 = pneg %p68
        $region14: #{tpu_custom_call.1} parent=11 // pred_check_branch
          %258 = sbr.rel (%p256) target = $region16
        $region15: #{tpu_custom_call.1} parent=11 // pred_region
          _
        $region16: #{tpu_custom_call.1} parent=11 // pred_fallthru
          _
        // Predicated region
        $region17: #{tpu_custom_call.1} parent=11 // pred_check
          %p259 = pneg %p89
        $region18: #{tpu_custom_call.1} parent=11 // pred_check_branch
          %261 = sbr.rel (%p259) target = $region20
        $region19: #{tpu_custom_call.1} parent=11 // pred_region
          _
        $region20: #{tpu_custom_call.1} parent=11 // pred_fallthru
          _
        // Predicated region
        $region21: #{tpu_custom_call.1} parent=11 // pred_check
          %p262 = pneg %p110
        $region22: #{tpu_custom_call.1} parent=11 // pred_check_branch
          %264 = sbr.rel (%p262) target = $region24
        $region23: #{tpu_custom_call.1} parent=11 // pred_region
          _
        $region24: #{tpu_custom_call.1} parent=11 // pred_fallthru
          _
        // Predicated region
        $region25: #{tpu_custom_call.1} parent=11 // pred_check
          %p265 = pneg %p131
        $region26: #{tpu_custom_call.1} parent=11 // pred_check_branch
          %267 = sbr.rel (%p265) target = $region28
        $region27: #{tpu_custom_call.1} parent=11 // pred_region
          _
        $region28: #{tpu_custom_call.1} parent=11 // pred_fallthru
          _
        // Predicated region
        $region29: #{tpu_custom_call.1} parent=11 // pred_check
          %p268 = pneg %p152
        $region30: #{tpu_custom_call.1} parent=11 // pred_check_branch
          %270 = sbr.rel (%p268) target = $region32
        $region31: #{tpu_custom_call.1} parent=11 // pred_region
          _
        $region32: #{tpu_custom_call.1} parent=11 // pred_fallthru
          _
        // Predicated region
        $region33: #{tpu_custom_call.1} parent=11 // pred_check
          %p271 = pneg %p173
        $region34: #{tpu_custom_call.1} parent=11 // pred_check_branch
          %273 = sbr.rel (%p271) target = $region36
        $region35: #{tpu_custom_call.1} parent=11 // pred_region
          _
        $region36: #{tpu_custom_call.1} parent=11 // pred_fallthru
          _
        // Predicated region
        $region37: #{tpu_custom_call.1} parent=11 // pred_check
          %p274 = pneg %p194
        $region38: #{tpu_custom_call.1} parent=11 // pred_check_branch
          %276 = sbr.rel (%p274) target = $region40
        $region39: #{tpu_custom_call.1} parent=11 // pred_region
          _
        $region40: #{tpu_custom_call.1} parent=11 // pred_fallthru
          _
        // Predicated region
        $region41: #{tpu_custom_call.1} parent=11 // pred_check
          %p277 = pneg %p215
        $region42: #{tpu_custom_call.1} parent=11 // pred_check_branch
          %279 = sbr.rel (%p277) target = $region44
        $region43: #{tpu_custom_call.1} parent=11 // pred_region
          _
        $region44: #{tpu_custom_call.1} parent=11 // pred_fallthru
          _
      $region12: #{tpu_custom_call.1} parent=5 // pred_fallthru
        _
      %p280 = scmp.lt.s32.totalorder %s21, 4
      // Predicated region
      $region45: #{tpu_custom_call.1} parent=5 // pred_check
        %p281 = pneg %p280
      $region46: #{tpu_custom_call.1} parent=5 // pred_check_branch
        %283 = sbr.rel (%p281) target = $region48
      $region47: #{tpu_custom_call.1} parent=5 // pred_region
        // Predicated region
        $region49: #{tpu_custom_call.1} parent=47 // pred_check
          %p284 = pneg %p41
        $region50: #{tpu_custom_call.1} parent=47 // pred_check_branch
          %286 = sbr.rel (%p284) target = $region52
        $region51: #{tpu_custom_call.1} parent=47 // pred_region
          %s287 = sand.u32 %s31, 1
          %s288 = scalar_lea.sflag [#allocation3], %s287
          %s289 = sand.u32 %s31, 1
          %s290 = smul.addr %s289, 128
          %s291 = scalar_lea.vmem [#allocation2], %s290
          %s292 = smul.u32 16, %s21
          %s293 = ssub.s32 63, %s292
          %p294 = scmp.lt.s32.totalorder %s293, 16
          %s295 = scalar_select %p294, %s293, 16
          %s296 = smul.u32 8, %s295
          %s297 = ssub.s32 128, %s296
          %s298 = sshll.u32 %s297, 4
          %299 = vsyncadd %s288, %s298
          %p300 = scmp.ne.s32.totalorder 0, %s296
          %s301 = smul.addr %s292, 8
          %s302 = scalar_lea.hbm %s0, %s301
          %s303 = smul.u32 8, %s295
          %s304 = sshll.u32 %s302, 4
          %s305 = int_to_ptr.hbm [resolvable:$true] %s304
          %s306 = sshll.u32 %s291, 4
          %s307 = int_to_ptr.vmem [resolvable:$true] %s306
          %s308 = sshll.u32 %s303, 4
          %312 = dma.hbm_to_vmem [thread:$0]  (%p300), %s305, %s308, %s307, %s288, 128, 128, 8
        $region52: #{tpu_custom_call.1} parent=47 // pred_fallthru
          _
      $region48: #{tpu_custom_call.1} parent=5 // pred_fallthru
        _
      %p313 = scmp.le.s32.totalorder 1, %s21
      %p314 = scmp.lt.s32.totalorder %s21, 5
      %p315 = pnand %p313, %p314
      %p316 = pneg %p315
      // Predicated region
      $region53: #{tpu_custom_call.1} parent=5 // pred_check
        _
      $region54: #{tpu_custom_call.1} parent=5 // pred_check_branch
        %318 = sbr.rel (%p315) target = $region56
      $region55: #{tpu_custom_call.1} parent=5 // pred_region
        %s319 = ssub.s32 %s21, 1
        %s320 = sand.u32 %s34, 1
        %s321 = scalar_lea.sflag [#allocation3], %s320
        %s322 = sand.u32 %s34, 1
        %s323 = smul.addr %s322, 128
        %s324 = scalar_lea.vmem [#allocation2], %s323
        // Predicated region
        $region57: #{tpu_custom_call.1} parent=55 // pred_check
          %p325 = pneg %p47
        $region58: #{tpu_custom_call.1} parent=55 // pred_check_branch
          %327 = sbr.rel (%p325) target = $region60
        $region59: #{tpu_custom_call.1} parent=55 // pred_region
          %329 = dma.done %s321, 2048
        $region60: #{tpu_custom_call.1} parent=55 // pred_fallthru
          _
        %s330 = sand.u32 %s34, 1
        %s331 = scalar_lea.sflag [#allocation3], %s330
        %s332 = sand.u32 %s34, 1
        %s333 = smul.addr %s332, 128
        %s334 = scalar_lea.vmem [#allocation2], %s333
        %p335 = pneg %p47
        %p336 = pneg %p44
        %p337 = pneg %p68
        %p338 = pneg %p65
        %p339 = pneg %p89
        %p340 = pneg %p86
        %p341 = pneg %p110
        %p342 = pneg %p107
        %p343 = pneg %p131
        %p344 = pneg %p128
        %p345 = pneg %p152
        %p346 = pneg %p149
        %p347 = pneg %p173
        %p348 = pneg %p170
        %p349 = pneg %p194
        %p350 = pneg %p191
        %p351 = pneg %p215
        %p352 = pneg %p212
        %p353 = pneg %p241
        %p354 = pneg %p238
        %s355 = sand.u32 %s228, 1
        %s356 = scalar_lea.sflag [#allocation4], %s355
        %s357 = sand.u32 %s228, 1
        %s358 = smul.addr %s357, 128
        %s359 = scalar_lea.vmem [#allocation5], %s358
        %s360 = smul.u32 16, %s26
        %s361 = ssub.s32 63, %s360
        %p362 = scmp.lt.s32.totalorder %s361, 16
        %s363 = scalar_select %p362, %s361, 16
        %s364 = smul.u32 8, %s363
        %s365 = smul.u32 16, %s26
        %s366 = ssub.s32 63, %s365
        %p367 = scmp.lt.s32.totalorder %s366, 16
        %s368 = scalar_select %p367, %s366, 16
        %s369 = smul.u32 8, %s368
        %v370 = vld [vmem:[%s324] sm:$0xff]
        %v371 = vld [vmem:[%s324 + $0x8] sm:$0xff]
        %v372 = vld [vmem:[%s324 + $0x10] sm:$0xff]
        %v373 = vld [vmem:[%s324 + $0x18] sm:$0xff]
        %v374 = vld [vmem:[%s324 + $0x20] sm:$0xff]
        %v375 = vld [vmem:[%s324 + $0x28] sm:$0xff]
        %v376 = vld [vmem:[%s324 + $0x30] sm:$0xff]
        %v377 = vld [vmem:[%s324 + $0x38] sm:$0xff]
        %v378 = vld [vmem:[%s324 + $0x40] sm:$0xff]
        %v379 = vld [vmem:[%s324 + $0x48] sm:$0xff]
        %v380 = vld [vmem:[%s324 + $0x50] sm:$0xff]
        %v381 = vld [vmem:[%s324 + $0x58] sm:$0xff]
        %v382 = vld [vmem:[%s324 + $0x60] sm:$0xff]
        %v383 = vld [vmem:[%s324 + $0x68] sm:$0xff]
        %v384 = vld [vmem:[%s324 + $0x70] sm:$0xff]
        %v385 = vld [vmem:[%s324 + $0x78] sm:$0xff]
        %v386 = vld [vmem:[%s1] sm:$0xff]
        %v387 = vld [vmem:[%s1 + $0x8] sm:$0xff]
        %v388 = vld [vmem:[%s1 + $0x10] sm:$0xff]
        %v389 = vld [vmem:[%s1 + $0x18] sm:$0xff]
        %v390 = vld [vmem:[%s1 + $0x20] sm:$0xff]
        %v391 = vld [vmem:[%s1 + $0x28] sm:$0xff]
        %v392 = vld [vmem:[%s1 + $0x30] sm:$0xff]
        %v393 = vld [vmem:[%s1 + $0x38] sm:$0xff]
        %v394 = vld [vmem:[%s1 + $0x40] sm:$0xff]
        %v395 = vld [vmem:[%s1 + $0x48] sm:$0xff]
        %v396 = vld [vmem:[%s1 + $0x50] sm:$0xff]
        %v397 = vld [vmem:[%s1 + $0x58] sm:$0xff]
        %v398 = vld [vmem:[%s1 + $0x60] sm:$0xff]
        %v399 = vld [vmem:[%s1 + $0x68] sm:$0xff]
        %v400 = vld [vmem:[%s1 + $0x70] sm:$0xff]
        %v401 = vld [vmem:[%s1 + $0x78] sm:$0xff]
        %v402 = vld [vmem:[%s2] sm:$0x1]
        %v404 = vperm.slane %v402, 0
        %406 = vmatpush.msra.mxu0 %v401
        %407 = vmatpush.msra.mxu0 %v400
        %408 = vmatpush.msra.mxu0 %v399
        %409 = vmatpush.msra.mxu0 %v398
        %410 = vmatpush.msra.mxu0 %v397
        %411 = vmatpush.msra.mxu0 %v396
        %412 = vmatpush.msra.mxu0 %v395
        %413 = vmatpush.msra.mxu0 %v394
        %414 = vmatpush.msra.mxu0 %v393
        %415 = vmatpush.msra.mxu0 %v392
        %416 = vmatpush.msra.mxu0 %v391
        %417 = vmatpush.msra.mxu0 %v390
        %418 = vmatpush.msra.mxu0 %v389
        %419 = vmatpush.msra.mxu0 %v388
        %420 = vmatpush.msra.mxu0 %v387
        %421 = vmatpush.msra.mxu0 %v386
        %422 = vmatmul.f32.gmra.mxu0 %v370
        %v423 = vpop.f32.mrf.mxu0
        %v424 = vadd.f32 %v404, %v423
        %425 = vmatmul.f32.gmra.mxu0 %v371
        %v426 = vpop.f32.mrf.mxu0
        %v427 = vadd.f32 %v404, %v426
        %428 = vmatmul.f32.gmra.mxu0 %v372
        %v429 = vpop.f32.mrf.mxu0
        %v430 = vadd.f32 %v404, %v429
        %431 = vmatmul.f32.gmra.mxu0 %v373
        %v432 = vpop.f32.mrf.mxu0
        %v433 = vadd.f32 %v404, %v432
        %434 = vmatmul.f32.gmra.mxu0 %v374
        %v435 = vpop.f32.mrf.mxu0
        %v436 = vadd.f32 %v404, %v435
        %437 = vmatmul.f32.gmra.mxu0 %v375
        %v438 = vpop.f32.mrf.mxu0
        %v439 = vadd.f32 %v404, %v438
        %440 = vmatmul.f32.gmra.mxu0 %v376
        %v441 = vpop.f32.mrf.mxu0
        %v442 = vadd.f32 %v404, %v441
        %443 = vmatmul.f32.gmra.mxu0 %v377
        %v444 = vpop.f32.mrf.mxu0
        %v445 = vadd.f32 %v404, %v444
        %446 = vmatmul.f32.gmra.mxu0 %v378
        %v447 = vpop.f32.mrf.mxu0
        %v448 = vadd.f32 %v404, %v447
        %449 = vmatmul.f32.gmra.mxu0 %v379
        %v450 = vpop.f32.mrf.mxu0
        %v451 = vadd.f32 %v404, %v450
        %452 = vmatmul.f32.gmra.mxu0 %v380
        %v453 = vpop.f32.mrf.mxu0
        %v454 = vadd.f32 %v404, %v453
        %455 = vmatmul.f32.gmra.mxu0 %v381
        %v456 = vpop.f32.mrf.mxu0
        %v457 = vadd.f32 %v404, %v456
        %458 = vmatmul.f32.gmra.mxu0 %v382
        %v459 = vpop.f32.mrf.mxu0
        %v460 = vadd.f32 %v404, %v459
        %461 = vmatmul.f32.gmra.mxu0 %v383
        %v462 = vpop.f32.mrf.mxu0
        %v463 = vadd.f32 %v404, %v462
        %464 = vmatmul.f32.gmra.mxu0 %v384
        %v465 = vpop.f32.mrf.mxu0
        %v466 = vadd.f32 %v404, %v465
        %467 = vmatmul.f32.gmra.mxu0 %v385
        %v468 = vpop.f32.mrf.mxu0
        %v469 = vadd.f32 %v404, %v468
        %470 = vdwg.mxu0
        %v471 = vtanh.pop %v424
        %v472 = vtanh.pop %v427
        %v473 = vtanh.pop %v430
        %v474 = vtanh.pop %v433
        %v475 = vtanh.pop %v436
        %v476 = vtanh.pop %v439
        %v477 = vtanh.pop %v442
        %v478 = vtanh.pop %v445
        %v479 = vtanh.pop %v448
        %v480 = vtanh.pop %v451
        %v481 = vtanh.pop %v454
        %v482 = vtanh.pop %v457
        %v483 = vtanh.pop %v460
        %v484 = vtanh.pop %v463
        %v485 = vtanh.pop %v466
        %v486 = vtanh.pop %v469
        %v487 = vld [vmem:[%s3] sm:$0xff]
        %v488 = vld [vmem:[%s3 + $0x8] sm:$0xff]
        %v489 = vld [vmem:[%s3 + $0x10] sm:$0xff]
        %v490 = vld [vmem:[%s3 + $0x18] sm:$0xff]
        %v491 = vld [vmem:[%s3 + $0x20] sm:$0xff]
        %v492 = vld [vmem:[%s3 + $0x28] sm:$0xff]
        %v493 = vld [vmem:[%s3 + $0x30] sm:$0xff]
        %v494 = vld [vmem:[%s3 + $0x38] sm:$0xff]
        %v495 = vld [vmem:[%s4] sm:$0x1]
        %v497 = vperm.slane %v495, 0
        %vm499 = vcmask 523264
        %v501 = vsel %vm499, %v471, 0
        %v504 = vsel %vm499, %v472, 0
        %v507 = vsel %vm499, %v473, 0
        %v510 = vsel %vm499, %v474, 0
        %v513 = vsel %vm499, %v475, 0
        %v516 = vsel %vm499, %v476, 0
        %v519 = vsel %vm499, %v477, 0
        %v522 = vsel %vm499, %v478, 0
        %v525 = vsel %vm499, %v479, 0
        %v528 = vsel %vm499, %v480, 0
        %v531 = vsel %vm499, %v481, 0
        %v534 = vsel %vm499, %v482, 0
        %v537 = vsel %vm499, %v483, 0
        %v540 = vsel %vm499, %v484, 0
        %v543 = vsel %vm499, %v485, 0
        %v546 = vsel %vm499, %v486, 0
        %548 = vmatpush.msra.mxu0 0.0
        %549 = vmatpush.msra.mxu0 0.0
        %550 = vmatpush.msra.mxu0 0.0
        %551 = vmatpush.msra.mxu0 0.0
        %552 = vmatpush.msra.mxu0 0.0
        %553 = vmatpush.msra.mxu0 0.0
        %554 = vmatpush.msra.mxu0 0.0
        %555 = vmatpush.msra.mxu0 0.0
        %556 = vmatpush.msra.mxu0 %v494
        %557 = vmatpush.msra.mxu0 %v493
        %558 = vmatpush.msra.mxu0 %v492
        %559 = vmatpush.msra.mxu0 %v491
        %560 = vmatpush.msra.mxu0 %v490
        %561 = vmatpush.msra.mxu0 %v489
        %562 = vmatpush.msra.mxu0 %v488
        %563 = vmatpush.msra.mxu0 %v487
        %564 = vmatmul.f32.gmra.mxu0 %v501
        %v565 = vpop.f32.mrf.mxu0
        %v566 = vadd.f32 %v497, %v565
        %567 = vmatmul.f32.gmra.mxu0 %v504
        %v568 = vpop.f32.mrf.mxu0
        %v569 = vadd.f32 %v497, %v568
        %570 = vmatmul.f32.gmra.mxu0 %v507
        %v571 = vpop.f32.mrf.mxu0
        %v572 = vadd.f32 %v497, %v571
        %573 = vmatmul.f32.gmra.mxu0 %v510
        %v574 = vpop.f32.mrf.mxu0
        %v575 = vadd.f32 %v497, %v574
        %576 = vmatmul.f32.gmra.mxu0 %v513
        %v577 = vpop.f32.mrf.mxu0
        %v578 = vadd.f32 %v497, %v577
        %579 = vmatmul.f32.gmra.mxu0 %v516
        %v580 = vpop.f32.mrf.mxu0
        %v581 = vadd.f32 %v497, %v580
        %582 = vmatmul.f32.gmra.mxu0 %v519
        %v583 = vpop.f32.mrf.mxu0
        %v584 = vadd.f32 %v497, %v583
        %585 = vmatmul.f32.gmra.mxu0 %v522
        %v586 = vpop.f32.mrf.mxu0
        %v587 = vadd.f32 %v497, %v586
        %588 = vmatmul.f32.gmra.mxu0 %v525
        %v589 = vpop.f32.mrf.mxu0
        %v590 = vadd.f32 %v497, %v589
        %591 = vmatmul.f32.gmra.mxu0 %v528
        %v592 = vpop.f32.mrf.mxu0
        %v593 = vadd.f32 %v497, %v592
        %594 = vmatmul.f32.gmra.mxu0 %v531
        %v595 = vpop.f32.mrf.mxu0
        %v596 = vadd.f32 %v497, %v595
        %597 = vmatmul.f32.gmra.mxu0 %v534
        %v598 = vpop.f32.mrf.mxu0
        %v599 = vadd.f32 %v497, %v598
        %600 = vmatmul.f32.gmra.mxu0 %v537
        %v601 = vpop.f32.mrf.mxu0
        %v602 = vadd.f32 %v497, %v601
        %603 = vmatmul.f32.gmra.mxu0 %v540
        %v604 = vpop.f32.mrf.mxu0
        %v605 = vadd.f32 %v497, %v604
        %606 = vmatmul.f32.gmra.mxu0 %v543
        %v607 = vpop.f32.mrf.mxu0
        %v608 = vadd.f32 %v497, %v607
        %609 = vmatmul.f32.gmra.mxu0 %v546
        %v610 = vpop.f32.mrf.mxu0
        %v611 = vadd.f32 %v497, %v610
        %612 = vdwg.mxu0
        %v613 = vtanh.pop %v566
        %v614 = vtanh.pop %v569
        %v615 = vtanh.pop %v572
        %v616 = vtanh.pop %v575
        %v617 = vtanh.pop %v578
        %v618 = vtanh.pop %v581
        %v619 = vtanh.pop %v584
        %v620 = vtanh.pop %v587
        %v621 = vtanh.pop %v590
        %v622 = vtanh.pop %v593
        %v623 = vtanh.pop %v596
        %v624 = vtanh.pop %v599
        %v625 = vtanh.pop %v602
        %v626 = vtanh.pop %v605
        %v627 = vtanh.pop %v608
        %v628 = vtanh.pop %v611
        %v629 = vld [vmem:[%s5] sm:$0xff]
        %v630 = vld [vmem:[%s5 + $0x8] sm:$0xff]
        %v631 = vld [vmem:[%s5 + $0x10] sm:$0xff]
        %v632 = vld [vmem:[%s5 + $0x18] sm:$0xff]
        %v633 = vld [vmem:[%s6] sm:$0x1]
        %v635 = vperm.slane %v633, 0
        %vm637 = vcmask 261120
        %v639 = vsel %vm637, %v613, 0
        %v642 = vsel %vm637, %v614, 0
        %v645 = vsel %vm637, %v615, 0
        %v648 = vsel %vm637, %v616, 0
        %v651 = vsel %vm637, %v617, 0
        %v654 = vsel %vm637, %v618, 0
        %v657 = vsel %vm637, %v619, 0
        %v660 = vsel %vm637, %v620, 0
        %v663 = vsel %vm637, %v621, 0
        %v666 = vsel %vm637, %v622, 0
        %v669 = vsel %vm637, %v623, 0
        %v672 = vsel %vm637, %v624, 0
        %v675 = vsel %vm637, %v625, 0
        %v678 = vsel %vm637, %v626, 0
        %v681 = vsel %vm637, %v627, 0
        %v684 = vsel %vm637, %v628, 0
        %686 = vmatpush.msra.mxu0 0.0
        %687 = vmatpush.msra.mxu0 0.0
        %688 = vmatpush.msra.mxu0 0.0
        %689 = vmatpush.msra.mxu0 0.0
        %690 = vmatpush.msra.mxu0 0.0
        %691 = vmatpush.msra.mxu0 0.0
        %692 = vmatpush.msra.mxu0 0.0
        %693 = vmatpush.msra.mxu0 0.0
        %694 = vmatpush.msra.mxu0 0.0
        %695 = vmatpush.msra.mxu0 0.0
        %696 = vmatpush.msra.mxu0 0.0
        %697 = vmatpush.msra.mxu0 0.0
        %698 = vmatpush.msra.mxu0 %v632
        %699 = vmatpush.msra.mxu0 %v631
        %700 = vmatpush.msra.mxu0 %v630
        %701 = vmatpush.msra.mxu0 %v629
        %702 = vmatmul.f32.gmra.mxu0 %v639
        %v703 = vpop.f32.mrf.mxu0
        %v704 = vadd.f32 %v635, %v703
        %705 = vmatmul.f32.gmra.mxu0 %v642
        %v706 = vpop.f32.mrf.mxu0
        %v707 = vadd.f32 %v635, %v706
        %708 = vmatmul.f32.gmra.mxu0 %v645
        %v709 = vpop.f32.mrf.mxu0
        %v710 = vadd.f32 %v635, %v709
        %711 = vmatmul.f32.gmra.mxu0 %v648
        %v712 = vpop.f32.mrf.mxu0
        %v713 = vadd.f32 %v635, %v712
        %714 = vmatmul.f32.gmra.mxu0 %v651
        %v715 = vpop.f32.mrf.mxu0
        %v716 = vadd.f32 %v635, %v715
        %717 = vmatmul.f32.gmra.mxu0 %v654
        %v718 = vpop.f32.mrf.mxu0
        %v719 = vadd.f32 %v635, %v718
        %720 = vmatmul.f32.gmra.mxu0 %v657
        %v721 = vpop.f32.mrf.mxu0
        %v722 = vadd.f32 %v635, %v721
        %723 = vmatmul.f32.gmra.mxu0 %v660
        %v724 = vpop.f32.mrf.mxu0
        %v725 = vadd.f32 %v635, %v724
        %726 = vmatmul.f32.gmra.mxu0 %v663
        %v727 = vpop.f32.mrf.mxu0
        %v728 = vadd.f32 %v635, %v727
        %729 = vmatmul.f32.gmra.mxu0 %v666
        %v730 = vpop.f32.mrf.mxu0
        %v731 = vadd.f32 %v635, %v730
        %732 = vmatmul.f32.gmra.mxu0 %v669
        %v733 = vpop.f32.mrf.mxu0
        %v734 = vadd.f32 %v635, %v733
        %735 = vmatmul.f32.gmra.mxu0 %v672
        %v736 = vpop.f32.mrf.mxu0
        %v737 = vadd.f32 %v635, %v736
        %738 = vmatmul.f32.gmra.mxu0 %v675
        %v739 = vpop.f32.mrf.mxu0
        %v740 = vadd.f32 %v635, %v739
        %741 = vmatmul.f32.gmra.mxu0 %v678
        %v742 = vpop.f32.mrf.mxu0
        %v743 = vadd.f32 %v635, %v742
        %744 = vmatmul.f32.gmra.mxu0 %v681
        %v745 = vpop.f32.mrf.mxu0
        %v746 = vadd.f32 %v635, %v745
        %747 = vmatmul.f32.gmra.mxu0 %v684
        %v748 = vpop.f32.mrf.mxu0
        %v749 = vadd.f32 %v635, %v748
        %750 = vdwg.mxu0
        %v751 = vtanh.pop %v704
        %v752 = vtanh.pop %v707
        %v753 = vtanh.pop %v710
        %v754 = vtanh.pop %v713
        %v755 = vtanh.pop %v716
        %v756 = vtanh.pop %v719
        %v757 = vtanh.pop %v722
        %v758 = vtanh.pop %v725
        %v759 = vtanh.pop %v728
        %v760 = vtanh.pop %v731
        %v761 = vtanh.pop %v734
        %v762 = vtanh.pop %v737
        %v763 = vtanh.pop %v740
        %v764 = vtanh.pop %v743
        %v765 = vtanh.pop %v746
        %v766 = vtanh.pop %v749
        %v767 = vld [vmem:[%s7] sm:$0xff]
        %v768 = vld [vmem:[%s7 + $0x8] sm:$0xff]
        %v769 = vld [vmem:[%s7 + $0x10] sm:$0xff]
        %v770 = vld [vmem:[%s7 + $0x18] sm:$0xff]
        %v771 = vld [vmem:[%s7 + $0x20] sm:$0xff]
        %v772 = vld [vmem:[%s7 + $0x28] sm:$0xff]
        %v773 = vld [vmem:[%s7 + $0x30] sm:$0xff]
        %v774 = vld [vmem:[%s7 + $0x38] sm:$0xff]
        %v775 = vld [vmem:[%s8] sm:$0x1]
        %v777 = vperm.slane %v775, 0
        %v780 = vsel %vm499, %v751, 0
        %v783 = vsel %vm499, %v752, 0
        %v786 = vsel %vm499, %v753, 0
        %v789 = vsel %vm499, %v754, 0
        %v792 = vsel %vm499, %v755, 0
        %v795 = vsel %vm499, %v756, 0
        %v798 = vsel %vm499, %v757, 0
        %v801 = vsel %vm499, %v758, 0
        %v804 = vsel %vm499, %v759, 0
        %v807 = vsel %vm499, %v760, 0
        %v810 = vsel %vm499, %v761, 0
        %v813 = vsel %vm499, %v762, 0
        %v816 = vsel %vm499, %v763, 0
        %v819 = vsel %vm499, %v764, 0
        %v822 = vsel %vm499, %v765, 0
        %v825 = vsel %vm499, %v766, 0
        %827 = vmatpush.msra.mxu0 0.0
        %828 = vmatpush.msra.mxu0 0.0
        %829 = vmatpush.msra.mxu0 0.0
        %830 = vmatpush.msra.mxu0 0.0
        %831 = vmatpush.msra.mxu0 0.0
        %832 = vmatpush.msra.mxu0 0.0
        %833 = vmatpush.msra.mxu0 0.0
        %834 = vmatpush.msra.mxu0 0.0
        %835 = vmatpush.msra.mxu0 %v774
        %836 = vmatpush.msra.mxu0 %v773
        %837 = vmatpush.msra.mxu0 %v772
        %838 = vmatpush.msra.mxu0 %v771
        %839 = vmatpush.msra.mxu0 %v770
        %840 = vmatpush.msra.mxu0 %v769
        %841 = vmatpush.msra.mxu0 %v768
        %842 = vmatpush.msra.mxu0 %v767
        %843 = vmatmul.f32.gmra.mxu0 %v780
        %v844 = vpop.f32.mrf.mxu0
        %v845 = vadd.f32 %v777, %v844
        %846 = vmatmul.f32.gmra.mxu0 %v783
        %v847 = vpop.f32.mrf.mxu0
        %v848 = vadd.f32 %v777, %v847
        %849 = vmatmul.f32.gmra.mxu0 %v786
        %v850 = vpop.f32.mrf.mxu0
        %v851 = vadd.f32 %v777, %v850
        %852 = vmatmul.f32.gmra.mxu0 %v789
        %v853 = vpop.f32.mrf.mxu0
        %v854 = vadd.f32 %v777, %v853
        %855 = vmatmul.f32.gmra.mxu0 %v792
        %v856 = vpop.f32.mrf.mxu0
        %v857 = vadd.f32 %v777, %v856
        %858 = vmatmul.f32.gmra.mxu0 %v795
        %v859 = vpop.f32.mrf.mxu0
        %v860 = vadd.f32 %v777, %v859
        %861 = vmatmul.f32.gmra.mxu0 %v798
        %v862 = vpop.f32.mrf.mxu0
        %v863 = vadd.f32 %v777, %v862
        %864 = vmatmul.f32.gmra.mxu0 %v801
        %v865 = vpop.f32.mrf.mxu0
        %v866 = vadd.f32 %v777, %v865
        %867 = vmatmul.f32.gmra.mxu0 %v804
        %v868 = vpop.f32.mrf.mxu0
        %v869 = vadd.f32 %v777, %v868
        %870 = vmatmul.f32.gmra.mxu0 %v807
        %v871 = vpop.f32.mrf.mxu0
        %v872 = vadd.f32 %v777, %v871
        %873 = vmatmul.f32.gmra.mxu0 %v810
        %v874 = vpop.f32.mrf.mxu0
        %v875 = vadd.f32 %v777, %v874
        %876 = vmatmul.f32.gmra.mxu0 %v813
        %v877 = vpop.f32.mrf.mxu0
        %v878 = vadd.f32 %v777, %v877
        %879 = vmatmul.f32.gmra.mxu0 %v816
        %v880 = vpop.f32.mrf.mxu0
        %v881 = vadd.f32 %v777, %v880
        %882 = vmatmul.f32.gmra.mxu0 %v819
        %v883 = vpop.f32.mrf.mxu0
        %v884 = vadd.f32 %v777, %v883
        %885 = vmatmul.f32.gmra.mxu0 %v822
        %v886 = vpop.f32.mrf.mxu0
        %v887 = vadd.f32 %v777, %v886
        %888 = vmatmul.f32.gmra.mxu0 %v825
        %v889 = vpop.f32.mrf.mxu0
        %v890 = vadd.f32 %v777, %v889
        %891 = vdwg.mxu0
        %892 = vst [vmem:[%s359] sm:$0xff] %v845
        %893 = vst [vmem:[%s359 + $0x8] sm:$0xff] %v848
        %894 = vst [vmem:[%s359 + $0x10] sm:$0xff] %v851
        %895 = vst [vmem:[%s359 + $0x18] sm:$0xff] %v854
        %896 = vst [vmem:[%s359 + $0x20] sm:$0xff] %v857
        %897 = vst [vmem:[%s359 + $0x28] sm:$0xff] %v860
        %898 = vst [vmem:[%s359 + $0x30] sm:$0xff] %v863
        %899 = vst [vmem:[%s359 + $0x38] sm:$0xff] %v866
        %900 = vst [vmem:[%s359 + $0x40] sm:$0xff] %v869
        %901 = vst [vmem:[%s359 + $0x48] sm:$0xff] %v872
        %902 = vst [vmem:[%s359 + $0x50] sm:$0xff] %v875
        %903 = vst [vmem:[%s359 + $0x58] sm:$0xff] %v878
        %904 = vst [vmem:[%s359 + $0x60] sm:$0xff] %v881
        %905 = vst [vmem:[%s359 + $0x68] sm:$0xff] %v884
        %906 = vst [vmem:[%s359 + $0x70] sm:$0xff] %v887
        %907 = vst [vmem:[%s359 + $0x78] sm:$0xff] %v890
        %s908 = sand.u32 %s228, 1
        %s909 = scalar_lea.sflag [#allocation4], %s908
        %s910 = sand.u32 %s228, 1
        %s911 = smul.addr %s910, 128
        %s912 = scalar_lea.vmem [#allocation5], %s911
        // Predicated region
        $region61: #{tpu_custom_call.1} parent=55 // pred_check
          %p913 = pneg %p238
        $region62: #{tpu_custom_call.1} parent=55 // pred_check_branch
          %915 = sbr.rel (%p913) target = $region64
        $region63: #{tpu_custom_call.1} parent=55 // pred_region
          %s916 = smul.u32 16, %s26
          %s917 = ssub.s32 63, %s916
          %p918 = scmp.lt.s32.totalorder %s917, 16
          %s919 = scalar_select %p918, %s917, 16
          %s920 = smul.u32 8, %s919
          %s921 = ssub.s32 128, %s920
          %s922 = sshll.u32 %s921, 4
          %923 = vsyncadd %s909, %s922
          %p924 = scmp.ne.s32.totalorder 0, %s920
          %s925 = smul.addr %s916, 8
          %s926 = scalar_lea.hbm %s9, %s925
          %s927 = smul.u32 8, %s919
          %s928 = sshll.u32 %s912, 4
          %s929 = int_to_ptr.vmem [resolvable:$true] %s928
          %s930 = sshll.u32 %s926, 4
          %s931 = int_to_ptr.hbm [resolvable:$true] %s930
          %s932 = sshll.u32 %s927, 4
          %936 = dma.vmem_to_hbm [thread:$0]  (%p924), %s929, %s932, %s931, %s909, 128, 128, 8
        $region64: #{tpu_custom_call.1} parent=55 // pred_fallthru
          _
      $region56: #{tpu_custom_call.1} parent=5 // pred_fallthru
        _
      %p937 = scmp.le.s32.totalorder 2, %s21
      // Predicated region
      $region65: #{tpu_custom_call.1} parent=5 // pred_check
        %p938 = pneg %p937
      $region66: #{tpu_custom_call.1} parent=5 // pred_check_branch
        %940 = sbr.rel (%p938) target = $region68
      $region67: #{tpu_custom_call.1} parent=5 // pred_region
        %s941 = ssub.s32 %s21, 2
        // Predicated region
        $region69: #{tpu_custom_call.1} parent=67 // pred_check
          %p942 = pneg %p244
        $region70: #{tpu_custom_call.1} parent=67 // pred_check_branch
          %944 = sbr.rel (%p942) target = $region72
        $region71: #{tpu_custom_call.1} parent=67 // pred_region
          %s945 = sand.u32 %s229, 1
          %s946 = scalar_lea.sflag [#allocation4], %s945
          %s947 = sand.u32 %s229, 1
          %s948 = smul.addr %s947, 128
          %s949 = scalar_lea.vmem [#allocation5], %s948
          %951 = dma.done %s946, 2048
        $region72: #{tpu_custom_call.1} parent=67 // pred_fallthru
          _
      $region68: #{tpu_custom_call.1} parent=5 // pred_fallthru
        _
    $region6: #{tpu_custom_call.1} parent=1 // loop_footer
      %s25 = sadd.s32 1, %s21
    $region7: #{tpu_custom_call.1} parent=1 // loop_footer_branch
      %20 = sbr.rel target = $region3
    $region8: #{tpu_custom_call.1} parent=1 // loop_exit
      _
    %952 = vsyncpa [#allocation3], 1
    %s953 = scalar_lea.sflag [#allocation3], 1
    %954 = vsyncpa %s953, 1
    %955 = vsyncpa [#allocation4], 1
    %s956 = scalar_lea.sflag [#allocation4], 1
    %957 = vsyncpa %s956, 1

</llo_original>
